<compile_context>
chip_gen: v5e
topology: v5e:2x2
jax: 0.10.0
libtpu: 0.0.40
codegen_flags: <defaults>
</compile_context>

<pallas_src>
import functools
import math

import jax
import jax.numpy as jnp
from jax.experimental import pallas as pl
from jax.experimental.pallas import tpu as pltpu


# ----------------------------- helpers -------------------------------------- #

@functools.lru_cache(maxsize=None)
def _vmem_limit():
    """Generation-aware scoped-VMEM budget (v7x has only 64 MiB physical)."""
    cap = 128 * 1024 * 1024
    try:
        info = pltpu.get_tpu_info()
        cap = int(getattr(info, "vmem_capacity_bytes", cap))
    except Exception:
        pass
    return min(cap * 3 // 4, 100 * 1024 * 1024)


def _row_tile_target():
    # Big VMEM (v5e/v6e, 128 MiB) -> bigger row tiles to cut repeated weight
    # streaming; small VMEM (v7x, 64 MiB) -> keep tiles modest.
    return 512 if _vmem_limit() >= 80 * 1024 * 1024 else 256


def _round_up(x, m):
    return ((x + m - 1) // m) * m


def _pick_tile(dim, target, align):
    """Largest tile <= target that divides dim and is align-aligned; else full dim."""
    if dim <= target:
        return dim
    t = (target // align) * align
    while t >= align:
        if dim % t == 0:
            return t
        t -= align
    return dim  # full-dim block (always legal: equals the array dim)


def _gelu_tanh(x):
    # matches torch.nn.GELU(approximate='tanh')
    c = 0.7978845608028654  # sqrt(2/pi)
    return 0.5 * x * (1.0 + jnp.tanh(c * (x + 0.044715 * x * x * x)))


# ----------------------------- kernels -------------------------------------- #

def _linear_kernel(x_ref, w_ref, b_ref, *rest, activation, nk, has_residual):
    """Tiled bf16 matmul with f32 accumulator; bias/act/residual at k==last."""
    if has_residual:
        r_ref, o_ref, acc_ref = rest
    else:
        r_ref = None
        o_ref, acc_ref = rest

    k = pl.program_id(2)

    @pl.when(k == 0)
    def _init():
        acc_ref[...] = jnp.zeros_like(acc_ref)

    acc_ref[...] += jnp.dot(x_ref[...], w_ref[...],
                            preferred_element_type=jnp.float32)

    @pl.when(k == nk - 1)
    def _finalize():
        y = acc_ref[...] + b_ref[...]
        if activation == "gelu_tanh":
            y = _gelu_tanh(y)
        if has_residual:
            y = y + r_ref[...]
        o_ref[...] = y.astype(o_ref.dtype)


def _ln_linear_kernel(x_ref, g_ref, be_ref, w_ref, b_ref, o_ref, xn_ref, *,
                      eps, activation):
    """LayerNorm (f32 stats) computed once per row block (j==0) into a bf16
    VMEM scratch, then reused by every output-column tile of that row block."""
    @pl.when(pl.program_id(1) == 0)
    def _prologue():
        x = x_ref[...].astype(jnp.float32)
        mu = jnp.mean(x, axis=-1, keepdims=True)
        xc = x - mu
        var = jnp.mean(xc * xc, axis=-1, keepdims=True)
        xn = xc * jax.lax.rsqrt(var + eps) * g_ref[...] + be_ref[...]
        xn_ref[...] = xn.astype(xn_ref.dtype)

    y = jnp.dot(xn_ref[...], w_ref[...], preferred_element_type=jnp.float32)
    y = y + b_ref[...]
    if activation == "gelu_tanh":
        y = _gelu_tanh(y)
    o_ref[...] = y.astype(o_ref.dtype)


def _layernorm_kernel(x_ref, g_ref, b_ref, o_ref, *, eps):
    x = x_ref[...].astype(jnp.float32)
    mu = jnp.mean(x, axis=-1, keepdims=True)
    xc = x - mu
    var = jnp.mean(xc * xc, axis=-1, keepdims=True)
    y = xc * jax.lax.rsqrt(var + eps)
    o_ref[...] = (y * g_ref[...] + b_ref[...]).astype(o_ref.dtype)


def _attn_kernel(q_ref, k_ref, v_ref, o_ref, *, hb, dp, scale, n_real, n_pad):
    """hb heads per grid step; blocks are lane-aligned (head_dim padded to a
    multiple of 128) column slices of the qkv activation; query rows tiled."""
    q_all = q_ref[0]                      # (tq,  hb*dp)  bf16
    k_all = k_ref[0]                      # (Npad, hb*dp) bf16
    v_all = v_ref[0]
    need_mask = n_real != n_pad
    if need_mask:
        kidx = jax.lax.broadcasted_iota(jnp.int32, (1, n_pad), 1)
        kmask = kidx < n_real

    for h in range(hb):
        lo, hi = h * dp, (h + 1) * dp
        q = q_all[:, lo:hi] * scale       # scale on (tq,dp), not on (tq,Npad)
        k = k_all[:, lo:hi]
        v = v_all[:, lo:hi]
        # q @ k^T without materializing a transpose; f32 accumulation.
        s = jax.lax.dot_general(q, k, (((1,), (1,)), ((), ())),
                                preferred_element_type=jnp.float32)
        if need_mask:
            s = jnp.where(kmask, s, -1e30)
        m = jnp.max(s, axis=-1, keepdims=True)
        p = jnp.exp(s - m)
        l = jnp.sum(p, axis=-1, keepdims=True)
        o = jnp.dot(p.astype(v.dtype), v, preferred_element_type=jnp.float32)
        o = o * (1.0 / l)                 # exact normalization (post-PV)
        o_ref[0, :, lo:hi] = o.astype(o_ref.dtype)   # 128-aligned per-head store


# --------------------------- pallas wrappers --------------------------------- #

def linear(x, w, b, *, activation=None, residual=None, out_dtype=jnp.float32,
           tm=None, tn_target=512, tk_target=512):
    """x:(M,K) @ w:(K,N) + b [+ f32 residual], bf16 inputs / f32 accumulation."""
    M, K = x.shape
    _, N = w.shape
    if x.dtype != jnp.bfloat16:
        x = x.astype(jnp.bfloat16)
    if w.dtype != jnp.bfloat16:
        w = w.astype(jnp.bfloat16)
    tm = tm if tm is not None else _pick_tile(M, _row_tile_target(), 16)
    tn = _pick_tile(N, tn_target, 128)
    tk = _pick_tile(K, tk_target, 128)
    gm, gn, gk = M // tm, N // tn, K // tk

    in_specs = [
        pl.BlockSpec((tm, tk), lambda i, j, k: (i, k)),
        pl.BlockSpec((tk, tn), lambda i, j, k: (k, j)),
        pl.BlockSpec((1, tn), lambda i, j, k: (0, j)),
    ]
    args = [x, w, b.reshape(1, N).astype(jnp.float32)]
    has_residual = residual is not None
    if has_residual:
        residual = residual.astype(jnp.float32)
        if residual.shape[0] == M:
            in_specs.append(pl.BlockSpec((tm, tn), lambda i, j, k: (i, j)))
        else:
            rb = residual.shape[0] // tm   # row-block period (pos_embed broadcast)
            in_specs.append(pl.BlockSpec((tm, tn),
                                         lambda i, j, k, rb=rb: (i % rb, j)))
        args.append(residual)

    kernel = functools.partial(_linear_kernel, activation=activation, nk=gk,
                               has_residual=has_residual)
    return pl.pallas_call(
        kernel,
        out_shape=jax.ShapeDtypeStruct((M, N), out_dtype),
        grid=(gm, gn, gk),
        in_specs=in_specs,
        out_specs=pl.BlockSpec((tm, tn), lambda i, j, k: (i, j)),
        scratch_shapes=[pltpu.VMEM((tm, tn), jnp.float32)],
        compiler_params=pltpu.CompilerParams(
            dimension_semantics=("parallel", "parallel", "arbitrary"),
            vmem_limit_bytes=_vmem_limit()),
    )(*args)


def ln_linear(x, gamma, beta, w, b, *, activation=None, eps=1e-5,
              out_dtype=None, tn_target=512):
    """LayerNorm(x) @ w + b [-> gelu]; LN done once per row block (scratch)."""
    M, K = x.shape
    _, N = w.shape
    if w.dtype != jnp.bfloat16:
        w = w.astype(jnp.bfloat16)
    out_dtype = out_dtype if out_dtype is not None else x.dtype
    tm = _pick_tile(M, _row_tile_target(), 16)
    tn = _pick_tile(N, tn_target, 128)
    return pl.pallas_call(
        functools.partial(_ln_linear_kernel, eps=eps, activation=activation),
        out_shape=jax.ShapeDtypeStruct((M, N), out_dtype),
        grid=(M // tm, N // tn),
        in_specs=[pl.BlockSpec((tm, K), lambda i, j: (i, 0)),
                  pl.BlockSpec((1, K), lambda i, j: (0, 0)),
                  pl.BlockSpec((1, K), lambda i, j: (0, 0)),
                  pl.BlockSpec((K, tn), lambda i, j: (0, j)),
                  pl.BlockSpec((1, tn), lambda i, j: (0, j))],
        out_specs=pl.BlockSpec((tm, tn), lambda i, j: (i, j)),
        scratch_shapes=[pltpu.VMEM((tm, K), jnp.bfloat16)],
        compiler_params=pltpu.CompilerParams(
            dimension_semantics=("parallel", "arbitrary"),
            vmem_limit_bytes=_vmem_limit()),
    )(x, gamma.reshape(1, K).astype(jnp.float32),
      beta.reshape(1, K).astype(jnp.float32),
      w, b.reshape(1, N).astype(jnp.float32))


def layernorm(x, g, b, *, eps=1e-5):
    M, D = x.shape
    tm = _pick_tile(M, _row_tile_target(), 16)
    return pl.pallas_call(
        functools.partial(_layernorm_kernel, eps=eps),
        out_shape=jax.ShapeDtypeStruct((M, D), x.dtype),
        grid=(M // tm,),
        in_specs=[pl.BlockSpec((tm, D), lambda i: (i, 0)),
                  pl.BlockSpec((1, D), lambda i: (0, 0)),
                  pl.BlockSpec((1, D), lambda i: (0, 0))],
        out_specs=pl.BlockSpec((tm, D), lambda i: (i, 0)),
        compiler_params=pltpu.CompilerParams(
            dimension_semantics=("parallel",),
            vmem_limit_bytes=_vmem_limit()),
    )(x, g.reshape(1, D), b.reshape(1, D))


def attention(qkv, *, n_real, num_heads, head_dim_pad, scale):
    """qkv: (B, Npad, 3*H*dp) with column layout [3][head][dp] -> (B, Npad, H*dp).

    dp is the (128-multiple) padded head dim so per-head slices are lane
    aligned; hb heads are batched per grid step and query rows are tiled so the
    K/V DMAs pipeline and megacore gets independent work.
    """
    B, n_pad, _ = qkv.shape
    H, dp = num_heads, head_dim_pad
    hb = max(1, min(H, 512 // dp))
    while H % hb != 0:
        hb -= 1
    gh = H // hb
    bw = hb * dp
    tq = _pick_tile(n_pad, 128, 16)
    nq = n_pad // tq

    kernel = functools.partial(_attn_kernel, hb=hb, dp=dp, scale=scale,
                               n_real=n_real, n_pad=n_pad)
    return pl.pallas_call(
        kernel,
        out_shape=jax.ShapeDtypeStruct((B, n_pad, H * dp), qkv.dtype),
        grid=(B, gh, nq),
        in_specs=[pl.BlockSpec((1, tq, bw), lambda b, g, qi: (b, qi, g)),
                  pl.BlockSpec((1, n_pad, bw),
                               lambda b, g, qi, gh=gh: (b, 0, gh + g)),
                  pl.BlockSpec((1, n_pad, bw),
                               lambda b, g, qi, gh=gh: (b, 0, 2 * gh + g))],
        out_specs=pl.BlockSpec((1, tq, bw), lambda b, g, qi: (b, qi, g)),
        compiler_params=pltpu.CompilerParams(
            dimension_semantics=("parallel", "parallel", "parallel"),
            vmem_limit_bytes=_vmem_limit()),
    )(qkv, qkv, qkv)


# --------------------------- parameter prep ---------------------------------- #

def prepare_params(params, *, num_heads):
    """Zero-pad head_dim / mlp-hidden to multiples of 128 and cast matmul
    weights to bf16.  Biases, LN params and pos_embed stay f32."""
    D = params["patch_w"].shape[1]
    H = num_heads
    d = D // H
    dp = _round_up(d, 128)

    out = dict(
        patch_w=params["patch_w"].astype(jnp.bfloat16),
        patch_b=params["patch_b"],
        pos_embed=params["pos_embed"],
        norm_g=params["norm_g"], norm_b=params["norm_b"],
        head_dim=d, head_dim_pad=dp)

    blocks = []
    for blk in params["blocks"]:
        qkv_w = blk["qkv_w"].reshape(D, 3, H, d)
        qkv_w = jnp.pad(qkv_w, ((0, 0), (0, 0), (0, 0), (0, dp - d)))
        qkv_b = blk["qkv_b"].reshape(3, H, d)
        qkv_b = jnp.pad(qkv_b, ((0, 0), (0, 0), (0, dp - d)))
        proj_w = blk["proj_w"].reshape(H, d, D)
        proj_w = jnp.pad(proj_w, ((0, 0), (0, dp - d), (0, 0)))

        hid = blk["fc1_w"].shape[1]
        hp = _round_up(hid, 128)
        fc1_w = jnp.pad(blk["fc1_w"], ((0, 0), (0, hp - hid)))
        fc1_b = jnp.pad(blk["fc1_b"], ((0, hp - hid),))
        fc2_w = jnp.pad(blk["fc2_w"], ((0, hp - hid), (0, 0)))

        blocks.append(dict(
            qkv_w=qkv_w.reshape(D, 3 * H * dp).astype(jnp.bfloat16),
            qkv_b=qkv_b.reshape(3 * H * dp),
            proj_w=proj_w.reshape(H * dp, D).astype(jnp.bfloat16),
            proj_b=blk["proj_b"],
            fc1_w=fc1_w.astype(jnp.bfloat16), fc1_b=fc1_b,
            fc2_w=fc2_w.astype(jnp.bfloat16), fc2_b=blk["fc2_b"],
            ln1_g=blk["ln1_g"], ln1_b=blk["ln1_b"],
            ln2_g=blk["ln2_g"], ln2_b=blk["ln2_b"]))
    out["blocks"] = blocks
    return out


# ------------------------------ model ---------------------------------------- #

def vision_transformer(img, params, *, num_heads, patch=14):
    B, C, Himg, Wimg = img.shape
    p = patch
    h, w = Himg // p, Wimg // p
    # LinearPatchEmbedding reshape/permute (pure-indexing glue, stays in JAX)
    x = img.reshape(B, C, h, p, w, p).transpose(0, 2, 4, 1, 3, 5)
    x = x.reshape(B, h * w, C * p * p)
    N = h * w
    D = params["patch_w"].shape[1]
    H = num_heads

    pp = prepare_params(params, num_heads=num_heads)
    d, dp = pp["head_dim"], pp["head_dim_pad"]
    scale = 1.0 / math.sqrt(d)          # NOTE: scale uses the ORIGINAL head dim

    # Pad sequence to a sublane/lane-friendly length (729 -> 768 at prod size);
    # padded key rows are masked inside attention, padded query rows dropped.
    seq_align = 128 if N >= 128 else 16
    n_pad = _round_up(N, seq_align)
    if n_pad != N:
        x = jnp.pad(x, ((0, 0), (0, n_pad - N), (0, 0)))
    pos = params["pos_embed"].reshape(N, D)
    if n_pad != N:
        pos = jnp.pad(pos, ((0, n_pad - N), (0, 0)))

    tm_rows = _pick_tile(n_pad, _row_tile_target(), 16)  # divides n_pad -> pos broadcast ok
    M = B * n_pad

    # patch embed with pos_embed folded in as a batch-broadcast residual
    xf = linear(x.reshape(M, C * p * p), pp["patch_w"], pp["patch_b"],
                residual=pos, tm=tm_rows)                           # (M, D) f32

    for blk in pp["blocks"]:
        # ---- x = x + proj(attn(LN1(x))) ----
        qkv = ln_linear(xf, blk["ln1_g"], blk["ln1_b"],
                        blk["qkv_w"], blk["qkv_b"],
                        out_dtype=jnp.bfloat16)                     # (M, 3*H*dp)
        o = attention(qkv.reshape(B, n_pad, 3 * H * dp), n_real=N,
                      num_heads=H, head_dim_pad=dp, scale=scale)    # (B, n_pad, H*dp)
        xf = linear(o.reshape(M, H * dp), blk["proj_w"], blk["proj_b"],
                    residual=xf, tm=tm_rows)                        # (M, D) f32
        # ---- x = x + fc2(gelu(fc1(LN2(x)))) ----
        hmid = ln_linear(xf, blk["ln2_g"], blk["ln2_b"],
                         blk["fc1_w"], blk["fc1_b"],
                         activation="gelu_tanh", out_dtype=jnp.bfloat16)
        xf = linear(hmid, blk["fc2_w"], blk["fc2_b"], residual=xf, tm=tm_rows)

    xf = layernorm(xf, params["norm_g"], params["norm_b"])
    return xf.reshape(B, n_pad, D)[:, :N, :]


def init_params(key, *, in_dim, embed_dim, mlp_hidden, depth, embed_len):
    keys = jax.random.split(key, 2 + depth)

    def lin_init(k, fan_in, fan_out):
        kw, kb = jax.random.split(k)
        w = jax.random.normal(kw, (fan_in, fan_out), jnp.float32) / math.sqrt(fan_in)
        b = jax.random.normal(kb, (fan_out,), jnp.float32) * 0.01
        return w, b

    patch_w, patch_b = lin_init(keys[0], in_dim, embed_dim)
    pos_embed = jax.random.normal(keys[1], (1, embed_len, embed_dim), jnp.float32) * 0.02
    blocks = []
    for i in range(depth):
        k = jax.random.split(keys[2 + i], 4)
        qkv_w, qkv_b = lin_init(k[0], embed_dim, 3 * embed_dim)
        proj_w, proj_b = lin_init(k[1], embed_dim, embed_dim)
        fc1_w, fc1_b = lin_init(k[2], embed_dim, mlp_hidden)
        fc2_w, fc2_b = lin_init(k[3], mlp_hidden, embed_dim)
        blocks.append(dict(
            qkv_w=qkv_w, qkv_b=qkv_b, proj_w=proj_w, proj_b=proj_b,
            fc1_w=fc1_w, fc1_b=fc1_b, fc2_w=fc2_w, fc2_b=fc2_b,
            ln1_g=jnp.ones((embed_dim,), jnp.float32),
            ln1_b=jnp.zeros((embed_dim,), jnp.float32),
            ln2_g=jnp.ones((embed_dim,), jnp.float32),
            ln2_b=jnp.zeros((embed_dim,), jnp.float32)))
    return dict(patch_w=patch_w, patch_b=patch_b, pos_embed=pos_embed, blocks=blocks,
                norm_g=jnp.ones((embed_dim,), jnp.float32),
                norm_b=jnp.zeros((embed_dim,), jnp.float32))


# --------------------------- pure-JAX reference ------------------------------ #

def reference(img, params, *, num_heads, patch=14):
    B, C, H, W = img.shape
    p = patch
    h, w = H // p, W // p
    x = img.reshape(B, C, h, p, w, p).transpose(0, 2, 4, 1, 3, 5).reshape(B, h * w, C * p * p)
    x = x @ params["patch_w"] + params["patch_b"]
    x = x + params["pos_embed"]
    D = x.shape[-1]
    d = D // num_heads

    def ln(y, g, b):
        mu = y.mean(-1, keepdims=True)
        var = ((y - mu) ** 2).mean(-1, keepdims=True)
        return (y - mu) / jnp.sqrt(var + 1e-5) * g + b

    for blk in params["blocks"]:
        Bn, Nn, _ = x.shape
        hln = ln(x, blk["ln1_g"], blk["ln1_b"])
        qkv = (hln @ blk["qkv_w"] + blk["qkv_b"]).reshape(Bn, Nn, 3, num_heads, d)
        qkv = qkv.transpose(2, 0, 3, 1, 4)
        q, k, v = qkv[0], qkv[1], qkv[2]
        s = jnp.einsum("bhqd,bhkd->bhqk", q, k) / math.sqrt(d)
        a = jax.nn.softmax(s, axis=-1)
        o = jnp.einsum("bhqk,bhkd->bhqd", a, v).transpose(0, 2, 1, 3).reshape(Bn, Nn, D)
        x = x + (o @ blk["proj_w"] + blk["proj_b"])
        hln = ln(x, blk["ln2_g"], blk["ln2_b"])
        m = hln @ blk["fc1_w"] + blk["fc1_b"]
        m = 0.5 * m * (1.0 + jnp.tanh(0.7978845608028654 * (m + 0.044715 * m ** 3)))
        x = x + (m @ blk["fc2_w"] + blk["fc2_b"])
    return ln(x, params["norm_g"], params["norm_b"])


# ------------------------------- main ----------------------------------------- #

if __name__ == "__main__":
    key = jax.random.PRNGKey(0)
    kimg, kparams = jax.random.split(key)

    # Small-shape configuration consistent with the module's forward semantics:
    # patch 14x14, channels 3 -> patch feature dim 588; 3x3 patch grid (42x42
    # image) -> sequence length 9 (exercises the sequence-padding + key-masking
    # path, as 729 does at production size).  embed/heads/mlp/depth scaled down
    # from (1152, 16, 4304, 27) to (128, 16, 320, 2); mlp=320 exercises the
    # hidden-dim padding path (320 -> 384) like 4304 -> 4352 in production.
    B, C, patch = 2, 3, 14
    h = w = 3
    embed_dim, num_heads, mlp_hidden, depth = 128, 16, 320, 2

    img = jax.random.normal(kimg, (B, C, h * patch, w * patch), jnp.float32)
    params = init_params(kparams, in_dim=C * patch * patch, embed_dim=embed_dim,
                         mlp_hidden=mlp_hidden, depth=depth, embed_len=h * w)

    out = vision_transformer(img, params, num_heads=num_heads, patch=patch)
    out = jax.block_until_ready(out)

    ref = reference(img, params, num_heads=num_heads, patch=patch)
    assert out.shape == (B, h * w, embed_dim)
    err = float(jnp.max(jnp.abs(out - ref)))
    # bf16 matmul inputs (f32 accumulation, f32 LN/softmax) vs. an all-f32
    # reference -> relaxed tolerance, per the performance review.
    assert err < 8e-2, f"max abs err {err}"

    print("KERNEL_OK")
</pallas_src>

<mosaic_0001>
module attributes {stable_mosaic.version = 11 : i64} {
  func.func @_linear_kernel(%arg0: i32, %arg1: i32, %arg2: i32, %arg3: memref<16x588xbf16, #tpu.memory_space<vmem>>, %arg4: memref<588x128xbf16, #tpu.memory_space<vmem>>, %arg5: memref<1x128xf32, #tpu.memory_space<vmem>>, %arg6: memref<16x128xf32, #tpu.memory_space<vmem>>, %arg7: memref<16x128xf32, #tpu.memory_space<vmem>>, %arg8: memref<16x128xf32, #tpu.memory_space<vmem>>) attributes {dimension_semantics = [#tpu.dimension_semantics<parallel>, #tpu.dimension_semantics<parallel>, #tpu.dimension_semantics<arbitrary>], iteration_bounds = array<i64: 2, 1, 1>, scalar_prefetch = 0 : i64, scratch_operands = 1 : i64, tpu.core_type = #tpu.core_type<tc>, window_params = [{transform_indices = @transform_0, window_bounds = array<i64: 16, 588>}, {transform_indices = @transform_1, window_bounds = array<i64: 588, 128>}, {transform_indices = @transform_2, window_bounds = array<i64: 1, 128>}, {transform_indices = @transform_3, window_bounds = array<i64: 16, 128>}, {transform_indices = @transform_4, window_bounds = array<i64: 16, 128>}]} {
    %c0_i32 = arith.constant 0 : i32
    %0 = arith.cmpi eq, %arg2, %c0_i32 : i32
    %1 = arith.extui %0 : i1 to i32
    %c0_i32_0 = arith.constant 0 : i32
    %2 = arith.cmpi ne, %1, %c0_i32_0 : i32
    scf.if %2 {
      %cst_10 = arith.constant 0.000000e+00 : f32
      %12 = vector.broadcast %cst_10 : f32 to vector<16x128xf32>
      %c0_11 = arith.constant 0 : index
      %c0_12 = arith.constant 0 : index
      %13 = vector.load %arg8[%c0_11, %c0_12] : memref<16x128xf32, #tpu.memory_space<vmem>>, vector<16x128xf32>
      tpu.vector_store %arg8[%c0_11, %c0_12], %12 {strides = array<i32>} : memref<16x128xf32, #tpu.memory_space<vmem>>, vector<16x128xf32>,
    } else {
    }
    %c0 = arith.constant 0 : index
    %c0_1 = arith.constant 0 : index
    %3 = vector.load %arg8[%c0, %c0_1] : memref<16x128xf32, #tpu.memory_space<vmem>>, vector<16x128xf32>
    %c0_2 = arith.constant 0 : index
    %c0_3 = arith.constant 0 : index
    %4 = vector.load %arg3[%c0_2, %c0_3] : memref<16x588xbf16, #tpu.memory_space<vmem>>, vector<16x588xbf16>
    %c0_4 = arith.constant 0 : index
    %c0_5 = arith.constant 0 : index
    %5 = vector.load %arg4[%c0_4, %c0_5] : memref<588x128xbf16, #tpu.memory_space<vmem>>, vector<588x128xbf16>
    %cst = arith.constant dense<0.000000e+00> : vector<16x128xf32>
    %6 = tpu.matmul %4, %5, %cst {dimension_numbers = #tpu.dot_dimension_numbers<[1], [0], [0], [1], [0, 0, 1, 1], [], []>} : vector<16x588xbf16>, vector<588x128xbf16>, vector<16x128xf32> -> vector<16x128xf32>
    %7 = arith.addf %3, %6 : vector<16x128xf32>
    %c0_6 = arith.constant 0 : index
    %c0_7 = arith.constant 0 : index
    %8 = vector.load %arg8[%c0_6, %c0_7] : memref<16x128xf32, #tpu.memory_space<vmem>>, vector<16x128xf32>
    tpu.vector_store %arg8[%c0_6, %c0_7], %7 {strides = array<i32>} : memref<16x128xf32, #tpu.memory_space<vmem>>, vector<16x128xf32>,
    %c0_i32_8 = arith.constant 0 : i32
    %9 = arith.cmpi eq, %arg2, %c0_i32_8 : i32
    %10 = arith.extui %9 : i1 to i32
    %c0_i32_9 = arith.constant 0 : i32
    %11 = arith.cmpi ne, %10, %c0_i32_9 : i32
    scf.if %11 {
      %c0_10 = arith.constant 0 : index
      %c0_11 = arith.constant 0 : index
      %12 = vector.load %arg8[%c0_10, %c0_11] : memref<16x128xf32, #tpu.memory_space<vmem>>, vector<16x128xf32>
      %c0_12 = arith.constant 0 : index
      %c0_13 = arith.constant 0 : index
      %13 = vector.load %arg5[%c0_12, %c0_13] : memref<1x128xf32, #tpu.memory_space<vmem>>, vector<1x128xf32>
      %14 = vector.broadcast %13 : vector<1x128xf32> to vector<16x128xf32>
      %15 = arith.addf %12, %14 : vector<16x128xf32>
      %c0_14 = arith.constant 0 : index
      %c0_15 = arith.constant 0 : index
      %16 = vector.load %arg6[%c0_14, %c0_15] : memref<16x128xf32, #tpu.memory_space<vmem>>, vector<16x128xf32>
      %17 = arith.addf %15, %16 : vector<16x128xf32>
      %c0_16 = arith.constant 0 : index
      %c0_17 = arith.constant 0 : index
      %18 = vector.load %arg7[%c0_16, %c0_17] : memref<16x128xf32, #tpu.memory_space<vmem>>, vector<16x128xf32>
      tpu.vector_store %arg7[%c0_16, %c0_17], %17 {strides = array<i32>} : memref<16x128xf32, #tpu.memory_space<vmem>>, vector<16x128xf32>,
    } else {
    }
    return
  }
  func.func @transform_0(%arg0: i32, %arg1: i32, %arg2: i32) -> (i32, i32) {
    %c0_i32 = arith.constant 0 : i32
    return %arg0, %arg2 : i32, i32
  }
  func.func @transform_1(%arg0: i32, %arg1: i32, %arg2: i32) -> (i32, i32) {
    %c0_i32 = arith.constant 0 : i32
    return %arg2, %arg1 : i32, i32
  }
  func.func @transform_2(%arg0: i32, %arg1: i32, %arg2: i32) -> (i32, i32) {
    %c0_i32 = arith.constant 0 : i32
    %c0_i32_0 = arith.constant 0 : i32
    return %c0_i32, %arg1 : i32, i32
  }
  func.func @transform_3(%arg0: i32, %arg1: i32, %arg2: i32) -> (i32, i32) {
    %c1_i32 = arith.constant 1 : i32
    %c0_i32 = arith.constant 0 : i32
    %0 = arith.cmpi eq, %c1_i32, %c0_i32 : i32
    %c1_i32_0 = arith.constant 1 : i32
    %1 = arith.select %0, %c1_i32_0, %c1_i32 : i32
    %2 = arith.remsi %arg0, %1 : i32
    %c0_i32_1 = arith.constant 0 : i32
    %3 = arith.cmpi ne, %2, %c0_i32_1 : i32
    %c0_i32_2 = arith.constant 0 : i32
    %4 = arith.cmpi slt, %2, %c0_i32_2 : i32
    %c0_i32_3 = arith.constant 0 : i32
    %5 = arith.cmpi slt, %1, %c0_i32_3 : i32
    %6 = arith.xori %4, %5 : i1
    %7 = arith.andi %6, %3 : i1
    %8 = arith.addi %2, %1 : i32
    %9 = arith.select %7, %8, %2 : i32
    %c0_i32_4 = arith.constant 0 : i32
    return %9, %arg1 : i32, i32
  }
  func.func @transform_4(%arg0: i32, %arg1: i32, %arg2: i32) -> (i32, i32) {
    %c0_i32 = arith.constant 0 : i32
    return %arg0, %arg1 : i32, i32
  }
}

</mosaic_0001>

<llo_original>
// kernel: tpu_custom_call.1
$region0: #{tpu_custom_call.1}
  #allocation0 [shape = 'u32[]', space=smem, size = 0x4, offset = 0x4, fixed_abs, tag = 'smem constant byte address 0x4 - core index']
  #allocation1 [shape = 'u32[72,128]{1,0:T(1,128)}', space=vmem, size = 0x9000, scoped, tag = 'internal scratch']
  #allocation2 [shape = 'f32[16,128]{1,0:T(8,128)}', space=vmem, size = 0x2000, scoped, tag = 'scratch operand']
  %s0 = inlined_call_operand.hbm [shape: bf16[32,588], index: 0, kind: input, shape index: {}]
  %s1 = inlined_call_operand.hbm [shape: bf16[588,128], index: 1, kind: input, shape index: {}]
  %s2 = inlined_call_operand.vmem [shape: f32[1,128], index: 2, kind: input, shape index: {}]
  %s3 = inlined_call_operand.hbm [shape: f32[16,128], index: 3, kind: input, shape index: {}]
  %s4 = inlined_call_operand.hbm [shape: f32[32,128], index: 4, kind: output, shape index: {}]
  %s5 = sld [smem:[#allocation0]]
  $region69: #{tpu_custom_call.1} parent=0
    _
  %s7 = ssub.s32 1, %s5
  %s8 = scalar_select 0, %s7, %s5
  $region1: #{tpu_custom_call.1} parent=0
    #allocation3 [shape = 'u8[40960]{0}', space=vmem, size = 0xa000, scoped, tag = 'input window, operand 0']
    #allocation4 [shape = 's32[2]{0}', space=sflag, size = 0x8, scoped, tag = 'scoped memory for tpu_custom_call.1']
    #allocation5 [shape = 's32[2]{0}', space=sflag, size = 0x8, scoped, tag = 'scoped memory for tpu_custom_call.1']
    #allocation6 [shape = 'u8[151552]{0}', space=vmem, size = 0x25000, scoped, tag = 'input window, operand 1, single buffered']
    #allocation7 [shape = 's32[1]{0}', space=sflag, size = 0x4, scoped, tag = 'scoped memory for tpu_custom_call.1']
    #allocation8 [shape = 'u8[8192]{0}', space=vmem, size = 0x2000, scoped, tag = 'input window, operand 3, single buffered']
    #allocation9 [shape = 'u8[16384]{0}', space=vmem, size = 0x4000, scoped, tag = 'output window, operand 0']
    %9 = vsyncpa [#allocation4], 0
    %s10 = scalar_lea.sflag [#allocation4], 1
    %11 = vsyncpa %s10, 0
    %12 = vsyncpa [#allocation7], 0
    %13 = vsyncpa [#allocation5], 0
    %s14 = scalar_lea.sflag [#allocation5], 1
    %15 = vsyncpa %s14, 0
    loop: start=0, step=1, limit=4
    $region2: #{tpu_custom_call.1} parent=1 // loop_pre_header
      _
    $region3: #{tpu_custom_call.1} parent=1 // loop_header
      %s17 = sphi 0, %s21
      %p18 = scmp.ge.s32.totalorder %s17, 4
      %s24 = sphi 0, %s43
      %s25 = sphi 0, %s39
      %s26 = sphi 0, %s35
      %s27 = sphi 0, %s24
      %s28 = sphi 0, %s25
      %s29 = sphi 0, %s26
      %s30 = sphi 0, %s27
      %s31 = sphi 0, %s28
      %s32 = sphi 0, %s29
      %s48 = sphi 0, %s50
      %s51 = sphi 0, %s48
      %s52 = sphi 0, %s51
      %s68 = sphi 0, %s52
      %s76 = sphi 0, %s78
      %s79 = sphi 0, %s76
      %s80 = sphi 0, %s79
      %s96 = sphi 0, %s80
      %s102 = sphi 0, %s104
      %s105 = sphi 0, %s102
      %s106 = sphi 0, %s105
      %s122 = sphi 0, %s106
      %s128 = sphi 0, %s130
      %s131 = sphi 0, %s128
      %s132 = sphi 0, %s131
      %s148 = sphi 0, %s132
      %s156 = sphi 0, %s158
      %s159 = sphi 0, %s156
      %s160 = sphi 0, %s159
      %s176 = sphi 0, %s160
    $region4: #{tpu_custom_call.1} parent=1 // loop_header_branch
      %20 = sbr.rel (%p18) target = $region8
    $region5: #{tpu_custom_call.1} parent=1 // loop_body
      %s22 = ssub.s32 %s17, 1
      %s23 = ssub.s32 %s17, 2
      %s33 = sadd.s32 1, %s26
      %p34 = scmp.ge.s32.totalorder %s33, 1
      %s35 = scalar_select %p34, 0, %s33
      %s36 = sadd.s32 1, %s25
      %s37 = scalar_select %p34, %s36, %s25
      %p38 = scmp.ge.s32.totalorder %s37, 1
      %s39 = scalar_select %p38, 0, %s37
      %s40 = sadd.s32 1, %s24
      %s41 = scalar_select %p38, %s40, %s24
      %p42 = scmp.ge.s32.totalorder %s41, 2
      %s43 = scalar_select %p42, 0, %s41
      %s44 = ssub.s32 %s24, %s43
      %s45 = ssub.s32 %s26, %s35
      %s46 = sor.u32 %s44, %s45
      %p47 = scmp.eq.s32.totalorder %s46, 0
      %s49 = sadd.s32 %s48, 1
      %s50 = scalar_select %p47, %s48, %s49
      %p53 = pneg %p47
      %p54 = scmp.eq.s32.totalorder %s17, 1
      %p55 = por %p53, %p54
      %p56 = scmp.ne.s32.totalorder %s48, %s51
      %p57 = scmp.eq.s32.totalorder %s17, 0
      %p58 = por %p56, %p57
      %p59 = scmp.ne.s32.totalorder %s48, %s51
      %p60 = scmp.eq.s32.totalorder %s22, 1
      %p61 = por %p59, %p60
      %p62 = scmp.ne.s32.totalorder %s51, %s52
      %p63 = scmp.eq.s32.totalorder %s22, 0
      %p64 = por %p62, %p63
      %p65 = scmp.ne.s32.totalorder %s51, %s52
      %p66 = scmp.eq.s32.totalorder %s23, 1
      %p67 = por %p65, %p66
      %p69 = scmp.ne.s32.totalorder %s52, %s68
      %p70 = scmp.eq.s32.totalorder %s23, 0
      %p71 = por %p69, %p70
      %s72 = ssub.s32 %s26, %s35
      %s73 = ssub.s32 %s25, %s39
      %s74 = sor.u32 %s72, %s73
      %p75 = scmp.eq.s32.totalorder %s74, 0
      %s77 = sadd.s32 %s76, 1
      %s78 = scalar_select %p75, %s76, %s77
      %p81 = pneg %p75
      %p82 = scmp.eq.s32.totalorder %s17, 1
      %p83 = por %p81, %p82
      %p84 = scmp.ne.s32.totalorder %s76, %s79
      %p85 = scmp.eq.s32.totalorder %s17, 0
      %p86 = por %p84, %p85
      %p87 = scmp.ne.s32.totalorder %s76, %s79
      %p88 = scmp.eq.s32.totalorder %s22, 1
      %p89 = por %p87, %p88
      %p90 = scmp.ne.s32.totalorder %s79, %s80
      %p91 = scmp.eq.s32.totalorder %s22, 0
      %p92 = por %p90, %p91
      %p93 = scmp.ne.s32.totalorder %s79, %s80
      %p94 = scmp.eq.s32.totalorder %s23, 1
      %p95 = por %p93, %p94
      %p97 = scmp.ne.s32.totalorder %s80, %s96
      %p98 = scmp.eq.s32.totalorder %s23, 0
      %p99 = por %p97, %p98
      %s100 = ssub.s32 %s25, %s39
      %p101 = scmp.eq.s32.totalorder %s100, 0
      %s103 = sadd.s32 %s102, 1
      %s104 = scalar_select %p101, %s102, %s103
      %p107 = pneg %p101
      %p108 = scmp.eq.s32.totalorder %s17, 1
      %p109 = por %p107, %p108
      %p110 = scmp.ne.s32.totalorder %s102, %s105
      %p111 = scmp.eq.s32.totalorder %s17, 0
      %p112 = por %p110, %p111
      %p113 = scmp.ne.s32.totalorder %s102, %s105
      %p114 = scmp.eq.s32.totalorder %s22, 1
      %p115 = por %p113, %p114
      %p116 = scmp.ne.s32.totalorder %s105, %s106
      %p117 = scmp.eq.s32.totalorder %s22, 0
      %p118 = por %p116, %p117
      %p119 = scmp.ne.s32.totalorder %s105, %s106
      %p120 = scmp.eq.s32.totalorder %s23, 1
      %p121 = por %p119, %p120
      %p123 = scmp.ne.s32.totalorder %s106, %s122
      %p124 = scmp.eq.s32.totalorder %s23, 0
      %p125 = por %p123, %p124
      %s126 = ssub.s32 %s25, %s39
      %p127 = scmp.eq.s32.totalorder %s126, 0
      %s129 = sadd.s32 %s128, 1
      %s130 = scalar_select %p127, %s128, %s129
      %p133 = pneg %p127
      %p134 = scmp.eq.s32.totalorder %s17, 1
      %p135 = por %p133, %p134
      %p136 = scmp.ne.s32.totalorder %s128, %s131
      %p137 = scmp.eq.s32.totalorder %s17, 0
      %p138 = por %p136, %p137
      %p139 = scmp.ne.s32.totalorder %s128, %s131
      %p140 = scmp.eq.s32.totalorder %s22, 1
      %p141 = por %p139, %p140
      %p142 = scmp.ne.s32.totalorder %s131, %s132
      %p143 = scmp.eq.s32.totalorder %s22, 0
      %p144 = por %p142, %p143
      %p145 = scmp.ne.s32.totalorder %s131, %s132
      %p146 = scmp.eq.s32.totalorder %s23, 1
      %p147 = por %p145, %p146
      %p149 = scmp.ne.s32.totalorder %s132, %s148
      %p150 = scmp.eq.s32.totalorder %s23, 0
      %p151 = por %p149, %p150
      %s152 = ssub.s32 %s24, %s43
      %s153 = ssub.s32 %s25, %s39
      %s154 = sor.u32 %s152, %s153
      %p155 = scmp.eq.s32.totalorder %s154, 0
      %s157 = sadd.s32 %s156, 1
      %s158 = scalar_select %p155, %s156, %s157
      %p161 = pneg %p155
      %p162 = scmp.eq.s32.totalorder %s17, 1
      %p163 = por %p161, %p162
      %p164 = scmp.ne.s32.totalorder %s156, %s159
      %p165 = scmp.eq.s32.totalorder %s17, 0
      %p166 = por %p164, %p165
      %p167 = scmp.ne.s32.totalorder %s156, %s159
      %p168 = scmp.eq.s32.totalorder %s22, 1
      %p169 = por %p167, %p168
      %p170 = scmp.ne.s32.totalorder %s159, %s160
      %p171 = scmp.eq.s32.totalorder %s22, 0
      %p172 = por %p170, %p171
      %p173 = scmp.ne.s32.totalorder %s159, %s160
      %p174 = scmp.eq.s32.totalorder %s23, 1
      %p175 = por %p173, %p174
      %p177 = scmp.ne.s32.totalorder %s160, %s176
      %p178 = scmp.eq.s32.totalorder %s23, 0
      %p179 = por %p177, %p178
      %p180 = scmp.le.s32.totalorder 1, %s17
      %p181 = scmp.lt.s32.totalorder %s17, 3
      %p182 = pnand %p180, %p181
      %p183 = pneg %p182
      // Predicated region
      $region9: #{tpu_custom_call.1} parent=5 // pred_check
        _
      $region10: #{tpu_custom_call.1} parent=5 // pred_check_branch
        %185 = sbr.rel (%p182) target = $region12
      $region11: #{tpu_custom_call.1} parent=5 // pred_region
        %s186 = ssub.s32 %s17, 1
        // Predicated region
        $region13: #{tpu_custom_call.1} parent=11 // pred_check
          %p187 = pneg %p92
        $region14: #{tpu_custom_call.1} parent=11 // pred_check_branch
          %189 = sbr.rel (%p187) target = $region16
        $region15: #{tpu_custom_call.1} parent=11 // pred_region
          %s190 = smul.u32 74, %s29
          %192 = vsyncadd [#allocation7], 0
          %s193 = sadd.s32 %s28, %s190
          %s194 = smul.addr %s193, 4
          %s195 = scalar_lea.hbm %s1, %s194
          %s196 = sshll.u32 %s195, 4
          %s197 = int_to_ptr.hbm [resolvable:$true] %s196
          %s198 = sshll.u32 [#allocation6], 4
          %s199 = int_to_ptr.vmem [resolvable:$true] %s198
          %204 = dma.hbm_to_vmem [thread:$0]  %s197, 4736, %s199, [#allocation7], 64, 64, 4
        $region16: #{tpu_custom_call.1} parent=11 // pred_fallthru
          _
        // Predicated region
        $region17: #{tpu_custom_call.1} parent=11 // pred_check
          %p205 = pneg %p118
        $region18: #{tpu_custom_call.1} parent=11 // pred_check_branch
          %207 = sbr.rel (%p205) target = $region20
        $region19: #{tpu_custom_call.1} parent=11 // pred_region
          %p208 = scmp.lt.s32.totalorder %s28, 0
          %s209 = scalar_select %p208, %s28, 0
          %s210 = scalar_lea.vmem %s2, %s209
        $region20: #{tpu_custom_call.1} parent=11 // pred_fallthru
          _
        // Predicated region
        $region21: #{tpu_custom_call.1} parent=11 // pred_check
          %p211 = pneg %p144
        $region22: #{tpu_custom_call.1} parent=11 // pred_check_branch
          %213 = sbr.rel (%p211) target = $region24
        $region23: #{tpu_custom_call.1} parent=11 // pred_region
          %215 = vsyncadd [#allocation7], 0
          %s216 = smul.addr %s28, 8
          %s217 = scalar_lea.hbm %s3, %s216
          %s218 = sshll.u32 %s217, 4
          %s219 = int_to_ptr.hbm [resolvable:$true] %s218
          %s220 = sshll.u32 [#allocation8], 4
          %s221 = int_to_ptr.vmem [resolvable:$true] %s220
          %226 = dma.hbm_to_vmem [thread:$0]  %s219, 256, %s221, [#allocation7], 128, 128, 8
        $region24: #{tpu_custom_call.1} parent=11 // pred_fallthru
          _
      $region12: #{tpu_custom_call.1} parent=5 // pred_fallthru
        _
      %p227 = scmp.lt.s32.totalorder %s17, 2
      // Predicated region
      $region25: #{tpu_custom_call.1} parent=5 // pred_check
        %p228 = pneg %p227
      $region26: #{tpu_custom_call.1} parent=5 // pred_check_branch
        %230 = sbr.rel (%p228) target = $region28
      $region27: #{tpu_custom_call.1} parent=5 // pred_region
        // Predicated region
        $region29: #{tpu_custom_call.1} parent=27 // pred_check
          %p231 = pneg %p58
        $region30: #{tpu_custom_call.1} parent=27 // pred_check_branch
          %233 = sbr.rel (%p231) target = $region32
        $region31: #{tpu_custom_call.1} parent=27 // pred_region
          %s234 = sand.u32 %s48, 1
          %s235 = scalar_lea.sflag [#allocation4], %s234
          %s236 = sand.u32 %s48, 1
          %s237 = smul.addr %s236, 40
          %s238 = scalar_lea.vmem [#allocation3], %s237
          %s239 = smul.u32 2, %s24
          %s240 = smul.u32 5, %s26
          %242 = vsyncadd %s235, 0
          %s243 = smul.addr %s239, 5
          %s244 = sadd.s32 %s240, %s243
          %s245 = smul.addr %s244, 4
          %s246 = scalar_lea.hbm %s0, %s245
          %s247 = sshll.u32 %s246, 4
          %s248 = int_to_ptr.hbm [resolvable:$true] %s247
          %s249 = sshll.u32 %s238, 4
          %s250 = int_to_ptr.vmem [resolvable:$true] %s249
          %255 = dma.hbm_to_vmem [thread:$0]  %s248, 640, %s250, %s235, 320, 320, 20
        $region32: #{tpu_custom_call.1} parent=27 // pred_fallthru
          _
      $region28: #{tpu_custom_call.1} parent=5 // pred_fallthru
        _
      %p256 = scmp.le.s32.totalorder 1, %s17
      %p257 = scmp.lt.s32.totalorder %s17, 3
      %p258 = pnand %p256, %p257
      %p259 = pneg %p258
      // Predicated region
      $region33: #{tpu_custom_call.1} parent=5 // pred_check
        _
      $region34: #{tpu_custom_call.1} parent=5 // pred_check_branch
        %261 = sbr.rel (%p258) target = $region36
      $region35: #{tpu_custom_call.1} parent=5 // pred_region
        %s262 = ssub.s32 %s17, 1
        %s263 = sand.u32 %s51, 1
        %s264 = scalar_lea.sflag [#allocation4], %s263
        %s265 = sand.u32 %s51, 1
        %s266 = smul.addr %s265, 40
        %s267 = scalar_lea.vmem [#allocation3], %s266
        // Predicated region
        $region37: #{tpu_custom_call.1} parent=35 // pred_check
          %p268 = pneg %p64
        $region38: #{tpu_custom_call.1} parent=35 // pred_check_branch
          %270 = sbr.rel (%p268) target = $region40
        $region39: #{tpu_custom_call.1} parent=35 // pred_region
          %272 = dma.done %s264, 640
        $region40: #{tpu_custom_call.1} parent=35 // pred_fallthru
          _
        // Predicated region
        $region41: #{tpu_custom_call.1} parent=35 // pred_check
          %p273 = pneg %p92
        $region42: #{tpu_custom_call.1} parent=35 // pred_check_branch
          %275 = sbr.rel (%p273) target = $region44
        $region43: #{tpu_custom_call.1} parent=35 // pred_region
          %277 = dma.done [#allocation7], 4736
        $region44: #{tpu_custom_call.1} parent=35 // pred_fallthru
          _
        // Predicated region
        $region45: #{tpu_custom_call.1} parent=35 // pred_check
          %p278 = pneg %p144
        $region46: #{tpu_custom_call.1} parent=35 // pred_check_branch
          %280 = sbr.rel (%p278) target = $region48
        $region47: #{tpu_custom_call.1} parent=35 // pred_region
          %282 = dma.done [#allocation7], 256
        $region48: #{tpu_custom_call.1} parent=35 // pred_fallthru
          _
        %s283 = sand.u32 %s51, 1
        %s284 = scalar_lea.sflag [#allocation4], %s283
        %s285 = sand.u32 %s51, 1
        %s286 = smul.addr %s285, 40
        %s287 = scalar_lea.vmem [#allocation3], %s286
        %p288 = pneg %p64
        %p289 = pneg %p61
        %p290 = pneg %p92
        %p291 = pneg %p89
        %p292 = scmp.lt.s32.totalorder %s28, 0
        %s293 = scalar_select %p292, %s28, 0
        %s294 = scalar_lea.vmem %s2, %s293
        %p295 = pneg %p118
        %p296 = pneg %p115
        %p297 = pneg %p144
        %p298 = pneg %p141
        %p299 = pneg %p172
        %p300 = pneg %p169
        %s301 = sand.u32 %s159, 1
        %s302 = scalar_lea.sflag [#allocation5], %s301
        %s303 = sand.u32 %s159, 1
        %s304 = smul.addr %s303, 16
        %s305 = scalar_lea.vmem [#allocation9], %s304
        %s306 = smul.u32 2, %s27
        %s307 = smul.u32 5, %s29
        %s308 = smul.u32 74, %s29
        %p309 = scmp.lt.s32.totalorder %s28, 0
        %s310 = scalar_select %p309, %s28, 0
        %s311 = scalar_lea.vmem %s2, %s310
        %s312 = smul.u32 2, %s27
        %p314 = scmp.eq.s32.totalorder %s29, 0
        // Predicated region
        $region49: #{tpu_custom_call.1} parent=35 // pred_check
          %p315 = pneg %p314
        $region50: #{tpu_custom_call.1} parent=35 // pred_check_branch
          %317 = sbr.rel (%p315) target = $region52
        $region51: #{tpu_custom_call.1} parent=35 // pred_region
          %318 = vst [vmem:[#allocation2] sm:$0xff] 0.0
          %319 = vst [vmem:[#allocation2 + $0x8] sm:$0xff] 0.0
        $region52: #{tpu_custom_call.1} parent=35 // pred_fallthru
          _
        %v320 = vld [vmem:[#allocation2] sm:$0xff]
        %v321 = vld [vmem:[#allocation2 + $0x8] sm:$0xff]
        %v322 = vld [vmem:[%s267] sm:$0xff]
        %v323 = vld [vmem:[%s267 + $0x8] sm:$0xff]
        %v324 = vld [vmem:[%s267 + $0x10] sm:$0xf]
        %v325 = vld [vmem:[%s267 + $0x14] sm:$0xff]
        %v326 = vld [vmem:[%s267 + $0x1c] sm:$0xff]
        %v327 = vld [vmem:[%s267 + $0x24] sm:$0xf]
        %v328 = vld [vmem:[#allocation6] sm:$0xf]
        %v329 = vld [vmem:[#allocation6 + $0x4] sm:$0xf]
        %v330 = vld [vmem:[#allocation6 + $0x8] sm:$0xf]
        %v331 = vld [vmem:[#allocation6 + $0xc] sm:$0xf]
        %v332 = vld [vmem:[#allocation6 + $0x10] sm:$0xf]
        %v333 = vld [vmem:[#allocation6 + $0x14] sm:$0xf]
        %v334 = vld [vmem:[#allocation6 + $0x18] sm:$0xf]
        %v335 = vld [vmem:[#allocation6 + $0x1c] sm:$0xf]
        %v336 = vld [vmem:[#allocation6 + $0x20] sm:$0xf]
        %v337 = vld [vmem:[#allocation6 + $0x24] sm:$0xf]
        %v338 = vld [vmem:[#allocation6 + $0x28] sm:$0xf]
        %v339 = vld [vmem:[#allocation6 + $0x2c] sm:$0xf]
        %v340 = vld [vmem:[#allocation6 + $0x30] sm:$0xf]
        %v341 = vld [vmem:[#allocation6 + $0x34] sm:$0xf]
        %v342 = vld [vmem:[#allocation6 + $0x38] sm:$0xf]
        %v343 = vld [vmem:[#allocation6 + $0x3c] sm:$0xf]
        %v344 = vld [vmem:[#allocation6 + $0x40] sm:$0xf]
        %v345 = vld [vmem:[#allocation6 + $0x44] sm:$0xf]
        %v346 = vld [vmem:[#allocation6 + $0x48] sm:$0xf]
        %v347 = vld [vmem:[#allocation6 + $0x4c] sm:$0xf]
        %v348 = vld [vmem:[#allocation6 + $0x50] sm:$0xf]
        %v349 = vld [vmem:[#allocation6 + $0x54] sm:$0xf]
        %v350 = vld [vmem:[#allocation6 + $0x58] sm:$0xf]
        %v351 = vld [vmem:[#allocation6 + $0x5c] sm:$0xf]
        %v352 = vld [vmem:[#allocation6 + $0x60] sm:$0xf]
        %v353 = vld [vmem:[#allocation6 + $0x64] sm:$0xf]
        %v354 = vld [vmem:[#allocation6 + $0x68] sm:$0xf]
        %v355 = vld [vmem:[#allocation6 + $0x6c] sm:$0xf]
        %v356 = vld [vmem:[#allocation6 + $0x70] sm:$0xf]
        %v357 = vld [vmem:[#allocation6 + $0x74] sm:$0xf]
        %v358 = vld [vmem:[#allocation6 + $0x78] sm:$0xf]
        %v359 = vld [vmem:[#allocation6 + $0x7c] sm:$0xf]
        %v360 = vld [vmem:[#allocation6 + $0x80] sm:$0xf]
        %v361 = vld [vmem:[#allocation6 + $0x84] sm:$0xf]
        %v362 = vld [vmem:[#allocation6 + $0x88] sm:$0xf]
        %v363 = vld [vmem:[#allocation6 + $0x8c] sm:$0xf]
        %v364 = vld [vmem:[#allocation6 + $0x90] sm:$0xf]
        %v365 = vld [vmem:[#allocation6 + $0x94] sm:$0xf]
        %v366 = vld [vmem:[#allocation6 + $0x98] sm:$0xf]
        %v367 = vld [vmem:[#allocation6 + $0x9c] sm:$0xf]
        %v368 = vld [vmem:[#allocation6 + $0xa0] sm:$0xf]
        %v369 = vld [vmem:[#allocation6 + $0xa4] sm:$0xf]
        %v370 = vld [vmem:[#allocation6 + $0xa8] sm:$0xf]
        %v371 = vld [vmem:[#allocation6 + $0xac] sm:$0xf]
        %v372 = vld [vmem:[#allocation6 + $0xb0] sm:$0xf]
        %v373 = vld [vmem:[#allocation6 + $0xb4] sm:$0xf]
        %v374 = vld [vmem:[#allocation6 + $0xb8] sm:$0xf]
        %v375 = vld [vmem:[#allocation6 + $0xbc] sm:$0xf]
        %v376 = vld [vmem:[#allocation6 + $0xc0] sm:$0xf]
        %v377 = vld [vmem:[#allocation6 + $0xc4] sm:$0xf]
        %v378 = vld [vmem:[#allocation6 + $0xc8] sm:$0xf]
        %v379 = vld [vmem:[#allocation6 + $0xcc] sm:$0xf]
        %v380 = vld [vmem:[#allocation6 + $0xd0] sm:$0xf]
        %v381 = vld [vmem:[#allocation6 + $0xd4] sm:$0xf]
        %v382 = vld [vmem:[#allocation6 + $0xd8] sm:$0xf]
        %v383 = vld [vmem:[#allocation6 + $0xdc] sm:$0xf]
        %v384 = vld [vmem:[#allocation6 + $0xe0] sm:$0xf]
        %v385 = vld [vmem:[#allocation6 + $0xe4] sm:$0xf]
        %v386 = vld [vmem:[#allocation6 + $0xe8] sm:$0xf]
        %v387 = vld [vmem:[#allocation6 + $0xec] sm:$0xf]
        %v388 = vld [vmem:[#allocation6 + $0xf0] sm:$0xf]
        %v389 = vld [vmem:[#allocation6 + $0xf4] sm:$0xf]
        %v390 = vld [vmem:[#allocation6 + $0xf8] sm:$0xf]
        %v391 = vld [vmem:[#allocation6 + $0xfc] sm:$0xf]
        %v392 = vld [vmem:[#allocation6 + $0x100] sm:$0xf]
        %v393 = vld [vmem:[#allocation6 + $0x104] sm:$0xf]
        %v394 = vld [vmem:[#allocation6 + $0x108] sm:$0xf]
        %v395 = vld [vmem:[#allocation6 + $0x10c] sm:$0xf]
        %v396 = vld [vmem:[#allocation6 + $0x110] sm:$0xf]
        %v397 = vld [vmem:[#allocation6 + $0x114] sm:$0xf]
        %v398 = vld [vmem:[#allocation6 + $0x118] sm:$0xf]
        %v399 = vld [vmem:[#allocation6 + $0x11c] sm:$0xf]
        %v400 = vld [vmem:[#allocation6 + $0x120] sm:$0xf]
        %v401 = vld [vmem:[#allocation6 + $0x124] sm:$0x3]
        %v408 = vunpack.c.l.b16 %v322
        %v409 = vunpack.c.h.b16 %v322
        %v410 = vunpack.c.l.b16 %v323
        %v411 = vunpack.c.h.b16 %v323
        %v412 = vunpack.c.l.b16 %v324
        %v413 = vunpack.c.l.b16 %v325
        %v414 = vunpack.c.h.b16 %v325
        %v415 = vunpack.c.l.b16 %v326
        %v416 = vunpack.c.h.b16 %v326
        %v417 = vunpack.c.l.b16 %v327
        %v418 = vpack.c.b16 %v413, %v408
        %v419 = vpack.c.b16 %v414, %v409
        %v420 = vpack.c.b16 %v415, %v410
        %v421 = vpack.c.b16 %v416, %v411
        %v422 = vpack.c.b16 %v417, %v412
        %v501 = vunpack.c.l.b16 %v328
        %v502 = vunpack.c.l.b16 %v329
        %v503 = vunpack.c.l.b16 %v330
        %v504 = vunpack.c.l.b16 %v331
        %v505 = vunpack.c.l.b16 %v332
        %v506 = vunpack.c.l.b16 %v333
        %v507 = vunpack.c.l.b16 %v334
        %v508 = vunpack.c.l.b16 %v335
        %v509 = vunpack.c.l.b16 %v336
        %v510 = vunpack.c.l.b16 %v337
        %v511 = vunpack.c.l.b16 %v338
        %v512 = vunpack.c.l.b16 %v339
        %v513 = vunpack.c.l.b16 %v340
        %v514 = vunpack.c.l.b16 %v341
        %v515 = vunpack.c.l.b16 %v342
        %v516 = vunpack.c.l.b16 %v343
        %v517 = vunpack.c.l.b16 %v344
        %v518 = vunpack.c.l.b16 %v345
        %v519 = vunpack.c.l.b16 %v346
        %v520 = vunpack.c.l.b16 %v347
        %v521 = vunpack.c.l.b16 %v348
        %v522 = vunpack.c.l.b16 %v349
        %v523 = vunpack.c.l.b16 %v350
        %v524 = vunpack.c.l.b16 %v351
        %v525 = vunpack.c.l.b16 %v352
        %v526 = vunpack.c.l.b16 %v353
        %v527 = vunpack.c.l.b16 %v354
        %v528 = vunpack.c.l.b16 %v355
        %v529 = vunpack.c.l.b16 %v356
        %v530 = vunpack.c.l.b16 %v357
        %v531 = vunpack.c.l.b16 %v358
        %v532 = vunpack.c.l.b16 %v359
        %v533 = vunpack.c.l.b16 %v360
        %v534 = vunpack.c.l.b16 %v361
        %v535 = vunpack.c.l.b16 %v362
        %v536 = vunpack.c.l.b16 %v363
        %v537 = vunpack.c.l.b16 %v364
        %v538 = vunpack.c.l.b16 %v365
        %v539 = vunpack.c.l.b16 %v366
        %v540 = vunpack.c.l.b16 %v367
        %v541 = vunpack.c.l.b16 %v368
        %v542 = vunpack.c.l.b16 %v369
        %v543 = vunpack.c.l.b16 %v370
        %v544 = vunpack.c.l.b16 %v371
        %v545 = vunpack.c.l.b16 %v372
        %v546 = vunpack.c.l.b16 %v373
        %v547 = vunpack.c.l.b16 %v374
        %v548 = vunpack.c.l.b16 %v375
        %v549 = vunpack.c.l.b16 %v376
        %v550 = vunpack.c.l.b16 %v377
        %v551 = vunpack.c.l.b16 %v378
        %v552 = vunpack.c.l.b16 %v379
        %v553 = vunpack.c.l.b16 %v380
        %v554 = vunpack.c.l.b16 %v381
        %v555 = vunpack.c.l.b16 %v382
        %v556 = vunpack.c.l.b16 %v383
        %v557 = vunpack.c.l.b16 %v384
        %v558 = vunpack.c.l.b16 %v385
        %v559 = vunpack.c.l.b16 %v386
        %v560 = vunpack.c.l.b16 %v387
        %v561 = vunpack.c.l.b16 %v388
        %v562 = vunpack.c.l.b16 %v389
        %v563 = vunpack.c.l.b16 %v390
        %v564 = vunpack.c.l.b16 %v391
        %v565 = vunpack.c.l.b16 %v392
        %v566 = vunpack.c.l.b16 %v393
        %v567 = vunpack.c.l.b16 %v394
        %v568 = vunpack.c.l.b16 %v395
        %v569 = vunpack.c.l.b16 %v396
        %v570 = vunpack.c.l.b16 %v397
        %v571 = vunpack.c.l.b16 %v398
        %v572 = vunpack.c.l.b16 %v399
        %v573 = vunpack.c.l.b16 %v400
        %v574 = vunpack.c.l.b16 %v401
        %v575 = vpack.c.b16 %v502, %v501
        %v576 = vpack.c.b16 %v504, %v503
        %v577 = vpack.c.b16 %v506, %v505
        %v578 = vpack.c.b16 %v508, %v507
        %v579 = vpack.c.b16 %v510, %v509
        %v580 = vpack.c.b16 %v512, %v511
        %v581 = vpack.c.b16 %v514, %v513
        %v582 = vpack.c.b16 %v516, %v515
        %v583 = vpack.c.b16 %v518, %v517
        %v584 = vpack.c.b16 %v520, %v519
        %v585 = vpack.c.b16 %v522, %v521
        %v586 = vpack.c.b16 %v524, %v523
        %v587 = vpack.c.b16 %v526, %v525
        %v588 = vpack.c.b16 %v528, %v527
        %v589 = vpack.c.b16 %v530, %v529
        %v590 = vpack.c.b16 %v532, %v531
        %v591 = vpack.c.b16 %v534, %v533
        %v592 = vpack.c.b16 %v536, %v535
        %v593 = vpack.c.b16 %v538, %v537
        %v594 = vpack.c.b16 %v540, %v539
        %v595 = vpack.c.b16 %v542, %v541
        %v596 = vpack.c.b16 %v544, %v543
        %v597 = vpack.c.b16 %v546, %v545
        %v598 = vpack.c.b16 %v548, %v547
        %v599 = vpack.c.b16 %v550, %v549
        %v600 = vpack.c.b16 %v552, %v551
        %v601 = vpack.c.b16 %v554, %v553
        %v602 = vpack.c.b16 %v556, %v555
        %v603 = vpack.c.b16 %v558, %v557
        %v604 = vpack.c.b16 %v560, %v559
        %v605 = vpack.c.b16 %v562, %v561
        %v606 = vpack.c.b16 %v564, %v563
        %v607 = vpack.c.b16 %v566, %v565
        %v608 = vpack.c.b16 %v568, %v567
        %v609 = vpack.c.b16 %v570, %v569
        %v610 = vpack.c.b16 %v572, %v571
        %v611 = vpack.c.b16 %v574, %v573
        %vm648 = vcmask 621568
        %v650 = vsel %vm648, %v422, 0
        %vm652 = vcmask 1045504
        %v654 = vsel %vm652, %v611, 0
        %656 = vmatpush.bf16.msra.mxu0 %v582
        %657 = vmatpush.bf16.msra.mxu0 %v581
        %658 = vmatpush.bf16.msra.mxu0 %v580
        %659 = vmatpush.bf16.msra.mxu0 %v579
        %660 = vmatpush.bf16.msra.mxu0 %v578
        %661 = vmatpush.bf16.msra.mxu0 %v577
        %662 = vmatpush.bf16.msra.mxu0 %v576
        %663 = vmatpush.bf16.msra.mxu0 %v575
        %664 = vmatmul.bf16.gmra.mxu0 %v418
        %v665 = vpop.f32.mrf.mxu0
        %v666 = vadd.f32 0.0, %v665
        %v667 = vpop.f32.mrf.mxu0
        %v668 = vadd.f32 0.0, %v667
        %669 = vdwg.mxu0
        %670 = vmatpush.bf16.msra.mxu0 %v590
        %671 = vmatpush.bf16.msra.mxu0 %v589
        %672 = vmatpush.bf16.msra.mxu0 %v588
        %673 = vmatpush.bf16.msra.mxu0 %v587
        %674 = vmatpush.bf16.msra.mxu0 %v586
        %675 = vmatpush.bf16.msra.mxu0 %v585
        %676 = vmatpush.bf16.msra.mxu0 %v584
        %677 = vmatpush.bf16.msra.mxu0 %v583
        %678 = vmatmul.bf16.gmra.mxu0 %v419
        %v679 = vpop.f32.mrf.mxu0
        %v680 = vadd.f32 %v666, %v679
        %v681 = vpop.f32.mrf.mxu0
        %v682 = vadd.f32 %v668, %v681
        %683 = vdwg.mxu0
        %684 = vmatpush.bf16.msra.mxu0 %v598
        %685 = vmatpush.bf16.msra.mxu0 %v597
        %686 = vmatpush.bf16.msra.mxu0 %v596
        %687 = vmatpush.bf16.msra.mxu0 %v595
        %688 = vmatpush.bf16.msra.mxu0 %v594
        %689 = vmatpush.bf16.msra.mxu0 %v593
        %690 = vmatpush.bf16.msra.mxu0 %v592
        %691 = vmatpush.bf16.msra.mxu0 %v591
        %692 = vmatmul.bf16.gmra.mxu0 %v420
        %v693 = vpop.f32.mrf.mxu0
        %v694 = vadd.f32 %v680, %v693
        %v695 = vpop.f32.mrf.mxu0
        %v696 = vadd.f32 %v682, %v695
        %697 = vdwg.mxu0
        %698 = vmatpush.bf16.msra.mxu0 %v606
        %699 = vmatpush.bf16.msra.mxu0 %v605
        %700 = vmatpush.bf16.msra.mxu0 %v604
        %701 = vmatpush.bf16.msra.mxu0 %v603
        %702 = vmatpush.bf16.msra.mxu0 %v602
        %703 = vmatpush.bf16.msra.mxu0 %v601
        %704 = vmatpush.bf16.msra.mxu0 %v600
        %705 = vmatpush.bf16.msra.mxu0 %v599
        %706 = vmatmul.bf16.gmra.mxu0 %v421
        %v707 = vpop.f32.mrf.mxu0
        %v708 = vadd.f32 %v694, %v707
        %v709 = vpop.f32.mrf.mxu0
        %v710 = vadd.f32 %v696, %v709
        %711 = vdwg.mxu0
        %712 = vmatpush.bf16.msra.mxu0 0
        %713 = vmatpush.bf16.msra.mxu0 0
        %714 = vmatpush.bf16.msra.mxu0 0
        %715 = vmatpush.bf16.msra.mxu0 %v654
        %716 = vmatpush.bf16.msra.mxu0 %v610
        %717 = vmatpush.bf16.msra.mxu0 %v609
        %718 = vmatpush.bf16.msra.mxu0 %v608
        %719 = vmatpush.bf16.msra.mxu0 %v607
        %720 = vmatmul.bf16.gmra.mxu0 %v650
        %v721 = vpop.f32.mrf.mxu0
        %v722 = vadd.f32 %v708, %v721
        %v723 = vpop.f32.mrf.mxu0
        %v724 = vadd.f32 %v710, %v723
        %725 = vdwg.mxu0
        %v726 = vadd.f32 %v320, %v722
        %v727 = vadd.f32 %v321, %v724
        %728 = vst [vmem:[#allocation2] sm:$0xff] %v726
        %729 = vst [vmem:[#allocation2 + $0x8] sm:$0xff] %v727
        // Predicated region
        $region53: #{tpu_custom_call.1} parent=35 // pred_check
          %p730 = pneg %p314
        $region54: #{tpu_custom_call.1} parent=35 // pred_check_branch
          %732 = sbr.rel (%p730) target = $region56
        $region55: #{tpu_custom_call.1} parent=35 // pred_region
          %v733 = vld [vmem:[#allocation2] sm:$0xff]
          %v734 = vld [vmem:[#allocation2 + $0x8] sm:$0xff]
          %v735 = vld [vmem:[%s311] sm:$0x1]
          %v737 = vperm.slane %v735, 0
          %v739 = vadd.f32 %v733, %v737
          %v740 = vadd.f32 %v734, %v737
          %v741 = vld [vmem:[#allocation8] sm:$0xff]
          %v742 = vld [vmem:[#allocation8 + $0x8] sm:$0xff]
          %v743 = vadd.f32 %v739, %v741
          %v744 = vadd.f32 %v740, %v742
          %745 = vst [vmem:[%s305] sm:$0xff] %v743
          %746 = vst [vmem:[%s305 + $0x8] sm:$0xff] %v744
        $region56: #{tpu_custom_call.1} parent=35 // pred_fallthru
          _
        %s747 = sand.u32 %s159, 1
        %s748 = scalar_lea.sflag [#allocation5], %s747
        %s749 = sand.u32 %s159, 1
        %s750 = smul.addr %s749, 16
        %s751 = scalar_lea.vmem [#allocation9], %s750
        // Predicated region
        $region57: #{tpu_custom_call.1} parent=35 // pred_check
          %p752 = pneg %p169
        $region58: #{tpu_custom_call.1} parent=35 // pred_check_branch
          %754 = sbr.rel (%p752) target = $region60
        $region59: #{tpu_custom_call.1} parent=35 // pred_region
          %s755 = smul.u32 2, %s27
          %757 = vsyncadd %s748, 0
          %s758 = sadd.s32 %s28, %s755
          %s759 = smul.addr %s758, 8
          %s760 = scalar_lea.hbm %s4, %s759
          %s761 = sshll.u32 %s751, 4
          %s762 = int_to_ptr.vmem [resolvable:$true] %s761
          %s763 = sshll.u32 %s760, 4
          %s764 = int_to_ptr.hbm [resolvable:$true] %s763
          %769 = dma.vmem_to_hbm [thread:$0]  %s762, 256, %s764, %s748, 128, 128, 8
        $region60: #{tpu_custom_call.1} parent=35 // pred_fallthru
          _
      $region36: #{tpu_custom_call.1} parent=5 // pred_fallthru
        _
      %p770 = scmp.le.s32.totalorder 2, %s17
      // Predicated region
      $region61: #{tpu_custom_call.1} parent=5 // pred_check
        %p771 = pneg %p770
      $region62: #{tpu_custom_call.1} parent=5 // pred_check_branch
        %773 = sbr.rel (%p771) target = $region64
      $region63: #{tpu_custom_call.1} parent=5 // pred_region
        %s774 = ssub.s32 %s17, 2
        // Predicated region
        $region65: #{tpu_custom_call.1} parent=63 // pred_check
          %p775 = pneg %p175
        $region66: #{tpu_custom_call.1} parent=63 // pred_check_branch
          %777 = sbr.rel (%p775) target = $region68
        $region67: #{tpu_custom_call.1} parent=63 // pred_region
          %s778 = sand.u32 %s160, 1
          %s779 = scalar_lea.sflag [#allocation5], %s778
          %s780 = sand.u32 %s160, 1
          %s781 = smul.addr %s780, 16
          %s782 = scalar_lea.vmem [#allocation9], %s781
          %784 = dma.done %s779, 256
        $region68: #{tpu_custom_call.1} parent=63 // pred_fallthru
          _
      $region64: #{tpu_custom_call.1} parent=5 // pred_fallthru
        _
    $region6: #{tpu_custom_call.1} parent=1 // loop_footer
      %s21 = sadd.s32 1, %s17
    $region7: #{tpu_custom_call.1} parent=1 // loop_footer_branch
      %16 = sbr.rel target = $region3
    $region8: #{tpu_custom_call.1} parent=1 // loop_exit
      _
    %785 = vsyncpa [#allocation4], 1
    %s786 = scalar_lea.sflag [#allocation4], 1
    %787 = vsyncpa %s786, 1
    %788 = vsyncpa [#allocation7], 1
    %789 = vsyncpa [#allocation5], 1
    %s790 = scalar_lea.sflag [#allocation5], 1
    %791 = vsyncpa %s790, 1

</llo_original>
